<compile_context>
chip_gen: v7x
topology: tpu7x:2x2x1
jax: 0.10.0
libtpu: 0.0.40
codegen_flags: <defaults>
</compile_context>

<pallas_src>
import jax
import jax.numpy as jnp
from jax.experimental import pallas as pl
from jax.experimental.pallas import tpu as pltpu

EPS = 1e-5          # PyTorch BatchNorm1d default eps
_LANE = 128


# ---------------------------------------------------------------------------
# Generation-aware knobs
# ---------------------------------------------------------------------------
def _vmem_capacity_bytes() -> int:
    try:
        return int(pltpu.get_tpu_info().vmem_capacity_bytes)
    except Exception:
        return 128 * 1024 * 1024   # v5e/v6e physical VMEM


def _default_mxu_stats_min_batch() -> int:
    """BN-stats MXU/XLU crossover: v5e's weak MXU (197 TF/s) + 3 XLUs keep the sublane
    reduction competitive much longer than on v6e/v7x."""
    try:
        kind = jax.devices()[0].device_kind.lower()
    except Exception:
        kind = ""
    return 512 if "v5" in kind else 128


# ---------------------------------------------------------------------------
# Kernel
# ---------------------------------------------------------------------------
def _make_nu_kernel(batch: int, apply_bn: bool, mxu_stats: bool, out_dtype):
    """Build the Nu forward kernel for a static batch size."""
    inv_b = 1.0 / float(batch)

    def kernel(y_ref,
               w0_ref, b0_ref, g0_ref, be0_ref,
               w1_ref, b1_ref, g1_ref, be1_ref,
               w2_ref, b2_ref,
               out_ref):
        # Built once (not per BN layer): JAX does not CSE broadcast_in_dim.
        ones_row = jnp.ones((1, batch), jnp.float32) if (apply_bn and mxu_stats) else None

        def bn_fused(h, g, be):
            # Single-pass stats: s1 = sum(h), s2 = sum(h*h).
            if mxu_stats:
                # Cross-sublane reduction on the MXU (free capacity at large batch).
                s1 = jnp.dot(ones_row, h, preferred_element_type=jnp.float32)
                s2 = jnp.dot(ones_row, h * h, preferred_element_type=jnp.float32)
            else:
                s1 = jnp.sum(h, axis=0, keepdims=True)
                s2 = jnp.sum(h * h, axis=0, keepdims=True)
            mean = s1 * inv_b
            # Biased variance (PyTorch training mode); clamp: E[x^2]-E[x]^2 can go
            # slightly negative from f32 cancellation on post-ReLU activations.
            var = jnp.maximum(s2 * inv_b - mean * mean, 0.0)
            scale = g * jax.lax.rsqrt(var + EPS)      # gamma folded in (EUP rsqrt)
            shift = be - mean * scale
            return h * scale + shift                  # 2 broadcast VPU ops total

        # --- layer 0: Linear -> ReLU -> (BatchNorm1d if batch > 1) ---
        h = jnp.dot(y_ref[...], w0_ref[...],
                    preferred_element_type=jnp.float32) + b0_ref[...]
        h = jnp.maximum(h, 0.0)
        if apply_bn:
            h = bn_fused(h, g0_ref[...], be0_ref[...])

        # --- layer 1: Linear -> ReLU -> (BatchNorm1d if batch > 1) ---
        h = jnp.dot(h.astype(jnp.bfloat16), w1_ref[...],
                    preferred_element_type=jnp.float32) + b1_ref[...]
        h = jnp.maximum(h, 0.0)
        if apply_bn:
            h = bn_fused(h, g1_ref[...], be1_ref[...])

        # --- final layer: Linear -> ReLU (no batchnorm) ---
        o = jnp.dot(h.astype(jnp.bfloat16), w2_ref[...],
                    preferred_element_type=jnp.float32) + b2_ref[...]
        out_ref[...] = jnp.maximum(o, 0.0).astype(out_dtype)

    return kernel


# ---------------------------------------------------------------------------
# One-time parameter prep (call at init, NOT per forward)
# ---------------------------------------------------------------------------
def prepare_nu_params(params, pad_out_to_lanes: bool = False):
    """Cast weights to bf16 once and (optionally) pad the final layer to a lane-dense
    multiple of 128 columns.  Padded columns have zero weight/bias, so ReLU gives
    exactly 0 there and the padded output buffer can be handed to the consumer without
    a slice copy."""
    (w0, b0, g0, be0, w1, b1, g1, be1, w2, b2) = params
    out_dim = w2.shape[1]
    pad = (-out_dim) % _LANE if pad_out_to_lanes else 0
    w2p = jnp.pad(w2, ((0, 0), (0, pad))) if pad else w2
    b2p = jnp.pad(b2, ((0, 0), (0, pad))) if pad else b2
    return dict(
        w0=w0.astype(jnp.bfloat16), b0=b0, g0=g0, be0=be0,
        w1=w1.astype(jnp.bfloat16), b1=b1, g1=g1, be1=be1,
        w2=w2p.astype(jnp.bfloat16), b2=b2p,
        out_dim=out_dim, out_dim_padded=out_dim + pad,
    )


# ---------------------------------------------------------------------------
# Forward
# ---------------------------------------------------------------------------
def nu_forward(y, prepared, *, out_dtype=jnp.float32, mxu_stats_min_batch=None):
    """prepared = prepare_nu_params(params).  Only per-call prep is y -> bf16."""
    batch = y.shape[0]
    out_dim_p = prepared["out_dim_padded"]
    if mxu_stats_min_batch is None:
        mxu_stats_min_batch = _default_mxu_stats_min_batch()

    apply_bn = batch > 1                               # PyTorch skips BN for batch == 1
    mxu_stats = apply_bn and batch >= mxu_stats_min_batch

    y_bf = y.astype(jnp.bfloat16)                      # the only per-call prep op

    w0, b0, g0, be0 = prepared["w0"], prepared["b0"], prepared["g0"], prepared["be0"]
    w1, b1, g1, be1 = prepared["w1"], prepared["b1"], prepared["g1"], prepared["be1"]
    w2, b2 = prepared["w2"], prepared["b2"]

    out_itemsize = jnp.dtype(out_dtype).itemsize
    h_dim = max(w0.shape[1], w1.shape[1], out_dim_p)

    # Generation-aware VMEM limit (v7x: 64 MiB physical -> ~32 MiB; v5e/v6e: 128 MiB).
    phys_vmem = _vmem_capacity_bytes()
    vmem_limit = max(32 * 1024 * 1024, phys_vmem // 2)

    # Rough monolithic VMEM footprint / batch ceiling check.
    weight_bytes = (2 * (w0.size + w1.size + w2.size)
                    + 4 * (b0.size + g0.size + be0.size + b1.size + g1.size + be1.size
                           + b2.size))
    act_bytes = batch * (2 * y.shape[1] + 6 * 4 * h_dim + out_itemsize * out_dim_p)
    if weight_bytes + act_bytes > int(0.9 * vmem_limit):
        # TODO(synk): batch-tiled grid + two-sweep BN for batches past the VMEM ceiling.
        raise ValueError(
            f"batch={batch} exceeds the monolithic-kernel VMEM ceiling for this TPU "
            f"generation (limit {vmem_limit >> 20} MiB); use a batch-tiled variant.")

    # Scheduler hint for XLA: dominant matmul flops + total bytes moved.
    flops = 2 * batch * (w0.shape[0] * w0.shape[1]
                         + w1.shape[0] * w1.shape[1]
                         + w2.shape[0] * w2.shape[1])
    bytes_accessed = 2 * y_bf.size + weight_bytes + batch * out_dim_p * out_itemsize
    transcendentals = (w0.shape[1] + w1.shape[1]) if apply_bn else 0

    kernel = _make_nu_kernel(batch, apply_bn, mxu_stats, out_dtype)
    vspec = pl.BlockSpec(memory_space=pltpu.MemorySpace.VMEM)

    out = pl.pallas_call(
        kernel,
        out_shape=jax.ShapeDtypeStruct((batch, out_dim_p), out_dtype),
        in_specs=[vspec] * 11,
        out_specs=vspec,
        compiler_params=pltpu.CompilerParams(vmem_limit_bytes=vmem_limit),
        cost_estimate=pl.CostEstimate(
            flops=flops,
            transcendentals=transcendentals,
            bytes_accessed=bytes_accessed),
    )(y_bf, w0, b0, g0, be0, w1, b1, g1, be1, w2, b2)

    # No wrapper-side slice: if pad_out_to_lanes was used at init, the padded buffer is
    # returned as-is (extra columns are exactly 0); the consumer reads [:, :out_dim].
    return out


# ---------------------------------------------------------------------------
# Init + references
# ---------------------------------------------------------------------------
def init_nu_params(key, y_dim, network_dims):
    """Deterministic init mimicking PyTorch Linear defaults (uniform +-1/sqrt(fan_in))
    and BatchNorm1d defaults (gamma=1, beta=0)."""
    dims = [y_dim] + list(network_dims)
    params = []
    for i in range(len(dims) - 1):
        fan_in, fan_out = dims[i], dims[i + 1]
        key, kw, kb = jax.random.split(key, 3)
        bound = 1.0 / jnp.sqrt(fan_in)
        w = jax.random.uniform(kw, (fan_in, fan_out), jnp.float32, -bound, bound)
        b = jax.random.uniform(kb, (1, fan_out), jnp.float32, -bound, bound)
        params.append(w)
        params.append(b)
        if i < len(dims) - 2:  # bn applied on all but the last layer
            params.append(jnp.ones((1, fan_out), jnp.float32))   # gamma
            params.append(jnp.zeros((1, fan_out), jnp.float32))  # beta
    return tuple(params)


def nu_reference_f32(y, params, apply_bn=True):
    """Pure-f32 JAX reference of the PyTorch forward pass (two-pass BN)."""
    (w0, b0, g0, be0, w1, b1, g1, be1, w2, b2) = params

    def bn(h, g, be):
        mean = jnp.mean(h, axis=0, keepdims=True)
        var = jnp.mean((h - mean) ** 2, axis=0, keepdims=True)
        return (h - mean) * jax.lax.rsqrt(var + EPS) * g + be

    h = jnp.maximum(y @ w0 + b0, 0.0)
    if apply_bn:
        h = bn(h, g0, be0)
    h = jnp.maximum(h @ w1 + b1, 0.0)
    if apply_bn:
        h = bn(h, g1, be1)
    return jnp.maximum(h @ w2 + b2, 0.0)


def nu_reference_bf16(y, params, apply_bn=True):
    """Reference mirroring the kernel's numerics (bf16 MXU operands, fused/clamped BN)."""
    (w0, b0, g0, be0, w1, b1, g1, be1, w2, b2) = params

    def bn(h, g, be):
        mean = jnp.mean(h, axis=0, keepdims=True)
        var = jnp.maximum(jnp.mean(h * h, axis=0, keepdims=True) - mean * mean, 0.0)
        scale = g * jax.lax.rsqrt(var + EPS)
        return h * scale + (be - mean * scale)

    def mm(a, w):
        return jnp.dot(a.astype(jnp.bfloat16), w.astype(jnp.bfloat16),
                       preferred_element_type=jnp.float32)

    h = jnp.maximum(mm(y, w0) + b0, 0.0)
    if apply_bn:
        h = bn(h, g0, be0)
    h = jnp.maximum(mm(h, w1) + b1, 0.0)
    if apply_bn:
        h = bn(h, g1, be1)
    return jnp.maximum(mm(h, w2) + b2, 0.0)


if __name__ == "__main__":
    # Small shapes: batch=8, y_dim=32, network_dims=[128, 128, 64]
    batch, y_dim = 8, 32
    network_dims = [128, 128, 64]
    out_dim = network_dims[-1]

    key = jax.random.PRNGKey(0)
    key, ky = jax.random.split(key)
    y = jax.random.normal(ky, (batch, y_dim), jnp.float32)
    params = init_nu_params(key, y_dim, network_dims)

    # One-time prep (init-time): bf16 weights, no per-call cast/pad ops.
    prepared = prepare_nu_params(params)

    # --- f32 output path (default) ---
    out = jax.block_until_ready(nu_forward(y, prepared))
    assert out.shape == (batch, out_dim)

    ref_bf16 = nu_reference_bf16(y, params)
    assert jnp.allclose(out, ref_bf16, atol=2e-3, rtol=2e-3), (
        float(jnp.max(jnp.abs(out - ref_bf16))))
    ref_f32 = nu_reference_f32(y, params)
    assert jnp.allclose(out, ref_f32, atol=1e-1, rtol=1e-1), (
        float(jnp.max(jnp.abs(out - ref_f32))))

    # --- bf16 output path (halved output HBM writeback) ---
    out_bf = jax.block_until_ready(nu_forward(y, prepared, out_dtype=jnp.bfloat16))
    assert out_bf.dtype == jnp.bfloat16 and out_bf.shape == (batch, out_dim)
    assert jnp.allclose(out_bf.astype(jnp.float32), ref_bf16, atol=2e-2, rtol=2e-2), (
        float(jnp.max(jnp.abs(out_bf.astype(jnp.float32) - ref_bf16))))

    # --- lane-dense padded output path (no post-kernel slice; padded cols are 0) ---
    prepared_pad = prepare_nu_params(params, pad_out_to_lanes=True)
    out_pad = jax.block_until_ready(nu_forward(y, prepared_pad))
    assert out_pad.shape == (batch, prepared_pad["out_dim_padded"])
    assert jnp.allclose(out_pad[:, :out_dim], out, atol=1e-6, rtol=1e-6)
    assert jnp.all(out_pad[:, out_dim:] == 0.0)

    # --- batch == 1: BN is skipped, matching PyTorch's `if y.size(0) > 1` ---
    y1 = y[:1]
    out1 = jax.block_until_ready(nu_forward(y1, prepared))
    ref1 = nu_reference_bf16(y1, params, apply_bn=False)
    assert out1.shape == (1, out_dim)
    assert jnp.allclose(out1, ref1, atol=2e-3, rtol=2e-3), (
        float(jnp.max(jnp.abs(out1 - ref1))))

    print("KERNEL_OK")
</pallas_src>

<mosaic_0001>
module attributes {stable_mosaic.version = 11 : i64} {
  func.func @kernel(%arg0: memref<8x32xbf16, #tpu.memory_space<vmem>>, %arg1: memref<32x128xbf16, #tpu.memory_space<vmem>>, %arg2: memref<1x128xf32, #tpu.memory_space<vmem>>, %arg3: memref<1x128xf32, #tpu.memory_space<vmem>>, %arg4: memref<1x128xf32, #tpu.memory_space<vmem>>, %arg5: memref<128x128xbf16, #tpu.memory_space<vmem>>, %arg6: memref<1x128xf32, #tpu.memory_space<vmem>>, %arg7: memref<1x128xf32, #tpu.memory_space<vmem>>, %arg8: memref<1x128xf32, #tpu.memory_space<vmem>>, %arg9: memref<128x64xbf16, #tpu.memory_space<vmem>>, %arg10: memref<1x64xf32, #tpu.memory_space<vmem>>, %arg11: memref<8x64xf32, #tpu.memory_space<vmem>>) attributes {dimension_semantics = [], scalar_prefetch = 0 : i64, scratch_operands = 0 : i64, tpu.core_type = #tpu.core_type<tc>} {
    %c0 = arith.constant 0 : index
    %c0_0 = arith.constant 0 : index
    %0 = vector.load %arg0[%c0, %c0_0] : memref<8x32xbf16, #tpu.memory_space<vmem>>, vector<8x32xbf16>
    %c0_1 = arith.constant 0 : index
    %c0_2 = arith.constant 0 : index
    %1 = vector.load %arg1[%c0_1, %c0_2] : memref<32x128xbf16, #tpu.memory_space<vmem>>, vector<32x128xbf16>
    %cst = arith.constant dense<0.000000e+00> : vector<8x128xf32>
    %2 = tpu.matmul %0, %1, %cst {dimension_numbers = #tpu.dot_dimension_numbers<[1], [0], [0], [1], [0, 0, 1, 1], [], []>} : vector<8x32xbf16>, vector<32x128xbf16>, vector<8x128xf32> -> vector<8x128xf32>
    %c0_3 = arith.constant 0 : index
    %c0_4 = arith.constant 0 : index
    %3 = vector.load %arg2[%c0_3, %c0_4] : memref<1x128xf32, #tpu.memory_space<vmem>>, vector<1x128xf32>
    %4 = vector.broadcast %3 : vector<1x128xf32> to vector<8x128xf32>
    %5 = arith.addf %2, %4 : vector<8x128xf32>
    %cst_5 = arith.constant 0.000000e+00 : f32
    %6 = vector.broadcast %cst_5 : f32 to vector<8x128xf32>
    %7 = arith.maximumf %5, %6 : vector<8x128xf32>
    %c0_6 = arith.constant 0 : index
    %c0_7 = arith.constant 0 : index
    %8 = vector.load %arg3[%c0_6, %c0_7] : memref<1x128xf32, #tpu.memory_space<vmem>>, vector<1x128xf32>
    %c0_8 = arith.constant 0 : index
    %c0_9 = arith.constant 0 : index
    %9 = vector.load %arg4[%c0_8, %c0_9] : memref<1x128xf32, #tpu.memory_space<vmem>>, vector<1x128xf32>
    %cst_10 = arith.constant dense<0.000000e+00> : vector<128xf32>
    %10 = vector.multi_reduction <add>, %7, %cst_10 [0] : vector<8x128xf32> to vector<128xf32>
    %11 = vector.shape_cast %10 : vector<128xf32> to vector<1x128xf32>
    %12 = arith.mulf %7, %7 : vector<8x128xf32>
    %cst_11 = arith.constant dense<0.000000e+00> : vector<128xf32>
    %13 = vector.multi_reduction <add>, %12, %cst_11 [0] : vector<8x128xf32> to vector<128xf32>
    %14 = vector.shape_cast %13 : vector<128xf32> to vector<1x128xf32>
    %cst_12 = arith.constant 1.250000e-01 : f32
    %15 = vector.broadcast %cst_12 : f32 to vector<1x128xf32>
    %16 = arith.mulf %11, %15 : vector<1x128xf32>
    %cst_13 = arith.constant 1.250000e-01 : f32
    %17 = vector.broadcast %cst_13 : f32 to vector<1x128xf32>
    %18 = arith.mulf %14, %17 : vector<1x128xf32>
    %19 = arith.mulf %16, %16 : vector<1x128xf32>
    %20 = arith.subf %18, %19 : vector<1x128xf32>
    %cst_14 = arith.constant 0.000000e+00 : f32
    %21 = vector.broadcast %cst_14 : f32 to vector<1x128xf32>
    %22 = arith.maximumf %20, %21 : vector<1x128xf32>
    %cst_15 = arith.constant 9.99999974E-6 : f32
    %23 = vector.broadcast %cst_15 : f32 to vector<1x128xf32>
    %24 = arith.addf %22, %23 : vector<1x128xf32>
    %25 = math.rsqrt %24 : vector<1x128xf32>
    %26 = arith.mulf %8, %25 : vector<1x128xf32>
    %27 = arith.mulf %16, %26 : vector<1x128xf32>
    %28 = arith.subf %9, %27 : vector<1x128xf32>
    %29 = vector.broadcast %26 : vector<1x128xf32> to vector<8x128xf32>
    %30 = arith.mulf %7, %29 : vector<8x128xf32>
    %31 = vector.broadcast %28 : vector<1x128xf32> to vector<8x128xf32>
    %32 = arith.addf %30, %31 : vector<8x128xf32>
    %33 = arith.truncf %32 : vector<8x128xf32> to vector<8x128xbf16>
    %c0_16 = arith.constant 0 : index
    %c0_17 = arith.constant 0 : index
    %34 = vector.load %arg5[%c0_16, %c0_17] : memref<128x128xbf16, #tpu.memory_space<vmem>>, vector<128x128xbf16>
    %cst_18 = arith.constant dense<0.000000e+00> : vector<8x128xf32>
    %35 = tpu.matmul %33, %34, %cst_18 {dimension_numbers = #tpu.dot_dimension_numbers<[1], [0], [0], [1], [0, 0, 1, 1], [], []>} : vector<8x128xbf16>, vector<128x128xbf16>, vector<8x128xf32> -> vector<8x128xf32>
    %c0_19 = arith.constant 0 : index
    %c0_20 = arith.constant 0 : index
    %36 = vector.load %arg6[%c0_19, %c0_20] : memref<1x128xf32, #tpu.memory_space<vmem>>, vector<1x128xf32>
    %37 = vector.broadcast %36 : vector<1x128xf32> to vector<8x128xf32>
    %38 = arith.addf %35, %37 : vector<8x128xf32>
    %cst_21 = arith.constant 0.000000e+00 : f32
    %39 = vector.broadcast %cst_21 : f32 to vector<8x128xf32>
    %40 = arith.maximumf %38, %39 : vector<8x128xf32>
    %c0_22 = arith.constant 0 : index
    %c0_23 = arith.constant 0 : index
    %41 = vector.load %arg7[%c0_22, %c0_23] : memref<1x128xf32, #tpu.memory_space<vmem>>, vector<1x128xf32>
    %c0_24 = arith.constant 0 : index
    %c0_25 = arith.constant 0 : index
    %42 = vector.load %arg8[%c0_24, %c0_25] : memref<1x128xf32, #tpu.memory_space<vmem>>, vector<1x128xf32>
    %cst_26 = arith.constant dense<0.000000e+00> : vector<128xf32>
    %43 = vector.multi_reduction <add>, %40, %cst_26 [0] : vector<8x128xf32> to vector<128xf32>
    %44 = vector.shape_cast %43 : vector<128xf32> to vector<1x128xf32>
    %45 = arith.mulf %40, %40 : vector<8x128xf32>
    %cst_27 = arith.constant dense<0.000000e+00> : vector<128xf32>
    %46 = vector.multi_reduction <add>, %45, %cst_27 [0] : vector<8x128xf32> to vector<128xf32>
    %47 = vector.shape_cast %46 : vector<128xf32> to vector<1x128xf32>
    %cst_28 = arith.constant 1.250000e-01 : f32
    %48 = vector.broadcast %cst_28 : f32 to vector<1x128xf32>
    %49 = arith.mulf %44, %48 : vector<1x128xf32>
    %cst_29 = arith.constant 1.250000e-01 : f32
    %50 = vector.broadcast %cst_29 : f32 to vector<1x128xf32>
    %51 = arith.mulf %47, %50 : vector<1x128xf32>
    %52 = arith.mulf %49, %49 : vector<1x128xf32>
    %53 = arith.subf %51, %52 : vector<1x128xf32>
    %cst_30 = arith.constant 0.000000e+00 : f32
    %54 = vector.broadcast %cst_30 : f32 to vector<1x128xf32>
    %55 = arith.maximumf %53, %54 : vector<1x128xf32>
    %cst_31 = arith.constant 9.99999974E-6 : f32
    %56 = vector.broadcast %cst_31 : f32 to vector<1x128xf32>
    %57 = arith.addf %55, %56 : vector<1x128xf32>
    %58 = math.rsqrt %57 : vector<1x128xf32>
    %59 = arith.mulf %41, %58 : vector<1x128xf32>
    %60 = arith.mulf %49, %59 : vector<1x128xf32>
    %61 = arith.subf %42, %60 : vector<1x128xf32>
    %62 = vector.broadcast %59 : vector<1x128xf32> to vector<8x128xf32>
    %63 = arith.mulf %40, %62 : vector<8x128xf32>
    %64 = vector.broadcast %61 : vector<1x128xf32> to vector<8x128xf32>
    %65 = arith.addf %63, %64 : vector<8x128xf32>
    %66 = arith.truncf %65 : vector<8x128xf32> to vector<8x128xbf16>
    %c0_32 = arith.constant 0 : index
    %c0_33 = arith.constant 0 : index
    %67 = vector.load %arg9[%c0_32, %c0_33] : memref<128x64xbf16, #tpu.memory_space<vmem>>, vector<128x64xbf16>
    %cst_34 = arith.constant dense<0.000000e+00> : vector<8x64xf32>
    %68 = tpu.matmul %66, %67, %cst_34 {dimension_numbers = #tpu.dot_dimension_numbers<[1], [0], [0], [1], [0, 0, 1, 1], [], []>} : vector<8x128xbf16>, vector<128x64xbf16>, vector<8x64xf32> -> vector<8x64xf32>
    %c0_35 = arith.constant 0 : index
    %c0_36 = arith.constant 0 : index
    %69 = vector.load %arg10[%c0_35, %c0_36] : memref<1x64xf32, #tpu.memory_space<vmem>>, vector<1x64xf32>
    %70 = vector.broadcast %69 : vector<1x64xf32> to vector<8x64xf32>
    %71 = arith.addf %68, %70 : vector<8x64xf32>
    %cst_37 = arith.constant 0.000000e+00 : f32
    %72 = vector.broadcast %cst_37 : f32 to vector<8x64xf32>
    %73 = arith.maximumf %71, %72 : vector<8x64xf32>
    %c0_38 = arith.constant 0 : index
    %c0_39 = arith.constant 0 : index
    %74 = vector.load %arg11[%c0_38, %c0_39] : memref<8x64xf32, #tpu.memory_space<vmem>>, vector<8x64xf32>
    tpu.vector_store %arg11[%c0_38, %c0_39], %73 {strides = array<i32>} : memref<8x64xf32, #tpu.memory_space<vmem>>, vector<8x64xf32>,
    return
  }
}

</mosaic_0001>

<llo_original>
// kernel: tpu_custom_call.1
$region0: #{tpu_custom_call.1}
  #allocation0 [shape = 'u32[]', space=smem, size = 0x4, offset = 0x4, fixed_abs, tag = 'smem constant byte address 0x4 - core index']
  #allocation1 [shape = 'u32[144,128]{1,0:T(1,128)}', space=vmem, size = 0x12000, scoped, tag = 'internal scratch']
  %s0 = inlined_call_operand.hbm [shape: bf16[8,32], index: 0, kind: input, shape index: {}]
  %s1 = inlined_call_operand.hbm [shape: bf16[32,128], index: 1, kind: input, shape index: {}]
  %s2 = inlined_call_operand.hbm [shape: f32[1,128], index: 2, kind: input, shape index: {}]
  %s3 = inlined_call_operand.hbm [shape: f32[1,128], index: 3, kind: input, shape index: {}]
  %s4 = inlined_call_operand.hbm [shape: f32[1,128], index: 4, kind: input, shape index: {}]
  %s5 = inlined_call_operand.hbm [shape: bf16[128,128], index: 5, kind: input, shape index: {}]
  %s6 = inlined_call_operand.hbm [shape: f32[1,128], index: 6, kind: input, shape index: {}]
  %s7 = inlined_call_operand.hbm [shape: f32[1,128], index: 7, kind: input, shape index: {}]
  %s8 = inlined_call_operand.hbm [shape: f32[1,128], index: 8, kind: input, shape index: {}]
  %s9 = inlined_call_operand.hbm [shape: bf16[128,64], index: 9, kind: input, shape index: {}]
  %s10 = inlined_call_operand.hbm [shape: f32[1,64], index: 10, kind: input, shape index: {}]
  %s11 = inlined_call_operand.hbm [shape: f32[8,64], index: 11, kind: output, shape index: {}]
  %s12 = sld [smem:[#allocation0]]
  $region98: #{tpu_custom_call.1} parent=0
    _
  %s14 = ssub.s32 1, %s12
  %s15 = scalar_select 0, %s14, %s12
  $region1: #{tpu_custom_call.1} parent=0
    #allocation2 [shape = 'u8[2048]{0}', space=vmem, size = 0x800, scoped, tag = 'input window, operand 0, single buffered']
    #allocation3 [shape = 's32[1]{0}', space=sflag, size = 0x4, scoped, tag = 'scoped memory for tpu_custom_call.1']
    #allocation4 [shape = 's32[1]{0}', space=sflag, size = 0x4, scoped, tag = 'scoped memory for tpu_custom_call.1']
    #allocation5 [shape = 'u8[8192]{0}', space=vmem, size = 0x2000, scoped, tag = 'input window, operand 1, single buffered']
    #allocation6 [shape = 's32[1]{0}', space=sflag, size = 0x4, scoped, tag = 'scoped memory for tpu_custom_call.1']
    #allocation7 [shape = 'u8[512]{0}', space=vmem, size = 0x400, scoped, tag = 'input window, operand 2, single buffered']
    #allocation8 [shape = 'u8[512]{0}', space=vmem, size = 0x400, scoped, tag = 'input window, operand 3, single buffered']
    #allocation9 [shape = 's32[1]{0}', space=sflag, size = 0x4, scoped, tag = 'scoped memory for tpu_custom_call.1']
    #allocation10 [shape = 'u8[512]{0}', space=vmem, size = 0x400, scoped, tag = 'input window, operand 4, single buffered']
    #allocation11 [shape = 'u8[32768]{0}', space=vmem, size = 0x8000, scoped, tag = 'input window, operand 5, single buffered']
    #allocation12 [shape = 's32[1]{0}', space=sflag, size = 0x4, scoped, tag = 'scoped memory for tpu_custom_call.1']
    #allocation13 [shape = 'u8[512]{0}', space=vmem, size = 0x400, scoped, tag = 'input window, operand 6, single buffered']
    #allocation14 [shape = 'u8[512]{0}', space=vmem, size = 0x400, scoped, tag = 'input window, operand 7, single buffered']
    #allocation15 [shape = 's32[1]{0}', space=sflag, size = 0x4, scoped, tag = 'scoped memory for tpu_custom_call.1']
    #allocation16 [shape = 'u8[512]{0}', space=vmem, size = 0x400, scoped, tag = 'input window, operand 8, single buffered']
    #allocation17 [shape = 'u8[32768]{0}', space=vmem, size = 0x8000, scoped, tag = 'input window, operand 9, single buffered']
    #allocation18 [shape = 's32[1]{0}', space=sflag, size = 0x4, scoped, tag = 'scoped memory for tpu_custom_call.1']
    #allocation19 [shape = 'u8[512]{0}', space=vmem, size = 0x400, scoped, tag = 'input window, operand 10, single buffered']
    #allocation20 [shape = 'u8[4096]{0}', space=vmem, size = 0x1000, scoped, tag = 'output window, operand 0, single buffered']
    %16 = vsyncpa [#allocation3], 0
    %17 = vsyncpa [#allocation6], 0
    %18 = vsyncpa [#allocation9], 0
    %19 = vsyncpa [#allocation12], 0
    %20 = vsyncpa [#allocation15], 0
    %21 = vsyncpa [#allocation18], 0
    %22 = vsyncpa [#allocation4], 0
    // Predicated region
    $region2: #{tpu_custom_call.1} parent=1 // pred_check
      _
    $region3: #{tpu_custom_call.1} parent=1 // pred_check_branch
      %24 = sbr.rel (0) target = $region5
    $region4: #{tpu_custom_call.1} parent=1 // pred_region
      %s26 = ssub.s32 64, 64
      %27 = vsyncadd [#allocation3], %s26
      %s29 = sshll.u32 [#allocation2], 4
      %s30 = int_to_ptr.vmem [resolvable:$true] %s29
      %32 = dma.hbm_to_vmem [thread:$0]  %s0, 64, %s30, [#allocation3]
    $region5: #{tpu_custom_call.1} parent=1 // pred_fallthru
      _
    // Predicated region
    $region6: #{tpu_custom_call.1} parent=1 // pred_check
      _
    $region7: #{tpu_custom_call.1} parent=1 // pred_check_branch
      %34 = sbr.rel (0) target = $region9
    $region8: #{tpu_custom_call.1} parent=1 // pred_region
      %s36 = ssub.s32 256, 256
      %37 = vsyncadd [#allocation6], %s36
      %s38 = sshll.u32 [#allocation5], 4
      %s39 = int_to_ptr.vmem [resolvable:$true] %s38
      %44 = dma.hbm_to_vmem [thread:$0]  %s1, 256, %s39, [#allocation6], 64, 64, 4
    $region9: #{tpu_custom_call.1} parent=1 // pred_fallthru
      _
    // Predicated region
    $region10: #{tpu_custom_call.1} parent=1 // pred_check
      _
    $region11: #{tpu_custom_call.1} parent=1 // pred_check_branch
      %46 = sbr.rel (0) target = $region13
    $region12: #{tpu_custom_call.1} parent=1 // pred_region
      %s48 = ssub.s32 16, 16
      %49 = vsyncadd [#allocation6], %s48
      %s51 = sshll.u32 [#allocation7], 4
      %s52 = int_to_ptr.vmem [resolvable:$true] %s51
      %54 = dma.hbm_to_vmem [thread:$0]  %s2, 16, %s52, [#allocation6]
    $region13: #{tpu_custom_call.1} parent=1 // pred_fallthru
      _
    // Predicated region
    $region14: #{tpu_custom_call.1} parent=1 // pred_check
      _
    $region15: #{tpu_custom_call.1} parent=1 // pred_check_branch
      %56 = sbr.rel (0) target = $region17
    $region16: #{tpu_custom_call.1} parent=1 // pred_region
      %s58 = ssub.s32 16, 16
      %59 = vsyncadd [#allocation9], %s58
      %s61 = sshll.u32 [#allocation8], 4
      %s62 = int_to_ptr.vmem [resolvable:$true] %s61
      %64 = dma.hbm_to_vmem [thread:$0]  %s3, 16, %s62, [#allocation9]
    $region17: #{tpu_custom_call.1} parent=1 // pred_fallthru
      _
    // Predicated region
    $region18: #{tpu_custom_call.1} parent=1 // pred_check
      _
    $region19: #{tpu_custom_call.1} parent=1 // pred_check_branch
      %66 = sbr.rel (0) target = $region21
    $region20: #{tpu_custom_call.1} parent=1 // pred_region
      %s68 = ssub.s32 16, 16
      %69 = vsyncadd [#allocation9], %s68
      %s71 = sshll.u32 [#allocation10], 4
      %s72 = int_to_ptr.vmem [resolvable:$true] %s71
      %74 = dma.hbm_to_vmem [thread:$0]  %s4, 16, %s72, [#allocation9]
    $region21: #{tpu_custom_call.1} parent=1 // pred_fallthru
      _
    // Predicated region
    $region22: #{tpu_custom_call.1} parent=1 // pred_check
      _
    $region23: #{tpu_custom_call.1} parent=1 // pred_check_branch
      %76 = sbr.rel (0) target = $region25
    $region24: #{tpu_custom_call.1} parent=1 // pred_region
      %s78 = ssub.s32 1024, 1024
      %79 = vsyncadd [#allocation12], %s78
      %s80 = sshll.u32 [#allocation11], 4
      %s81 = int_to_ptr.vmem [resolvable:$true] %s80
      %86 = dma.hbm_to_vmem [thread:$0]  %s5, 1024, %s81, [#allocation12], 64, 64, 4
    $region25: #{tpu_custom_call.1} parent=1 // pred_fallthru
      _
    // Predicated region
    $region26: #{tpu_custom_call.1} parent=1 // pred_check
      _
    $region27: #{tpu_custom_call.1} parent=1 // pred_check_branch
      %88 = sbr.rel (0) target = $region29
    $region28: #{tpu_custom_call.1} parent=1 // pred_region
      %s90 = ssub.s32 16, 16
      %91 = vsyncadd [#allocation12], %s90
      %s93 = sshll.u32 [#allocation13], 4
      %s94 = int_to_ptr.vmem [resolvable:$true] %s93
      %96 = dma.hbm_to_vmem [thread:$0]  %s6, 16, %s94, [#allocation12]
    $region29: #{tpu_custom_call.1} parent=1 // pred_fallthru
      _
    // Predicated region
    $region30: #{tpu_custom_call.1} parent=1 // pred_check
      _
    $region31: #{tpu_custom_call.1} parent=1 // pred_check_branch
      %98 = sbr.rel (0) target = $region33
    $region32: #{tpu_custom_call.1} parent=1 // pred_region
      %s100 = ssub.s32 16, 16
      %101 = vsyncadd [#allocation15], %s100
      %s103 = sshll.u32 [#allocation14], 4
      %s104 = int_to_ptr.vmem [resolvable:$true] %s103
      %106 = dma.hbm_to_vmem [thread:$0]  %s7, 16, %s104, [#allocation15]
    $region33: #{tpu_custom_call.1} parent=1 // pred_fallthru
      _
    // Predicated region
    $region34: #{tpu_custom_call.1} parent=1 // pred_check
      _
    $region35: #{tpu_custom_call.1} parent=1 // pred_check_branch
      %108 = sbr.rel (0) target = $region37
    $region36: #{tpu_custom_call.1} parent=1 // pred_region
      %s110 = ssub.s32 16, 16
      %111 = vsyncadd [#allocation15], %s110
      %s113 = sshll.u32 [#allocation16], 4
      %s114 = int_to_ptr.vmem [resolvable:$true] %s113
      %116 = dma.hbm_to_vmem [thread:$0]  %s8, 16, %s114, [#allocation15]
    $region37: #{tpu_custom_call.1} parent=1 // pred_fallthru
      _
    // Predicated region
    $region38: #{tpu_custom_call.1} parent=1 // pred_check
      _
    $region39: #{tpu_custom_call.1} parent=1 // pred_check_branch
      %118 = sbr.rel (0) target = $region41
    $region40: #{tpu_custom_call.1} parent=1 // pred_region
      %s120 = ssub.s32 1024, 1024
      %121 = vsyncadd [#allocation18], %s120
      %s122 = sshll.u32 [#allocation17], 4
      %s123 = int_to_ptr.vmem [resolvable:$true] %s122
      %128 = dma.hbm_to_vmem [thread:$0]  %s9, 1024, %s123, [#allocation18], 64, 64, 4
    $region41: #{tpu_custom_call.1} parent=1 // pred_fallthru
      _
    // Predicated region
    $region42: #{tpu_custom_call.1} parent=1 // pred_check
      _
    $region43: #{tpu_custom_call.1} parent=1 // pred_check_branch
      %130 = sbr.rel (0) target = $region45
    $region44: #{tpu_custom_call.1} parent=1 // pred_region
      %s132 = ssub.s32 16, 16
      %133 = vsyncadd [#allocation18], %s132
      %s135 = sshll.u32 [#allocation19], 4
      %s136 = int_to_ptr.vmem [resolvable:$true] %s135
      %138 = dma.hbm_to_vmem [thread:$0]  %s10, 16, %s136, [#allocation18]
    $region45: #{tpu_custom_call.1} parent=1 // pred_fallthru
      _
    // Predicated region
    $region46: #{tpu_custom_call.1} parent=1 // pred_check
      _
    $region47: #{tpu_custom_call.1} parent=1 // pred_check_branch
      %140 = sbr.rel (0) target = $region49
    $region48: #{tpu_custom_call.1} parent=1 // pred_region
      %141 = dma.done [#allocation3], 64
    $region49: #{tpu_custom_call.1} parent=1 // pred_fallthru
      _
    // Predicated region
    $region50: #{tpu_custom_call.1} parent=1 // pred_check
      _
    $region51: #{tpu_custom_call.1} parent=1 // pred_check_branch
      %143 = sbr.rel (0) target = $region53
    $region52: #{tpu_custom_call.1} parent=1 // pred_region
      %144 = dma.done [#allocation6], 256
    $region53: #{tpu_custom_call.1} parent=1 // pred_fallthru
      _
    // Predicated region
    $region54: #{tpu_custom_call.1} parent=1 // pred_check
      _
    $region55: #{tpu_custom_call.1} parent=1 // pred_check_branch
      %146 = sbr.rel (0) target = $region57
    $region56: #{tpu_custom_call.1} parent=1 // pred_region
      %147 = dma.done [#allocation6], 16
    $region57: #{tpu_custom_call.1} parent=1 // pred_fallthru
      _
    // Predicated region
    $region58: #{tpu_custom_call.1} parent=1 // pred_check
      _
    $region59: #{tpu_custom_call.1} parent=1 // pred_check_branch
      %149 = sbr.rel (0) target = $region61
    $region60: #{tpu_custom_call.1} parent=1 // pred_region
      %150 = dma.done [#allocation9], 16
    $region61: #{tpu_custom_call.1} parent=1 // pred_fallthru
      _
    // Predicated region
    $region62: #{tpu_custom_call.1} parent=1 // pred_check
      _
    $region63: #{tpu_custom_call.1} parent=1 // pred_check_branch
      %152 = sbr.rel (0) target = $region65
    $region64: #{tpu_custom_call.1} parent=1 // pred_region
      %153 = dma.done [#allocation9], 16
    $region65: #{tpu_custom_call.1} parent=1 // pred_fallthru
      _
    // Predicated region
    $region66: #{tpu_custom_call.1} parent=1 // pred_check
      _
    $region67: #{tpu_custom_call.1} parent=1 // pred_check_branch
      %155 = sbr.rel (0) target = $region69
    $region68: #{tpu_custom_call.1} parent=1 // pred_region
      %156 = dma.done [#allocation12], 1024
    $region69: #{tpu_custom_call.1} parent=1 // pred_fallthru
      _
    // Predicated region
    $region70: #{tpu_custom_call.1} parent=1 // pred_check
      _
    $region71: #{tpu_custom_call.1} parent=1 // pred_check_branch
      %158 = sbr.rel (0) target = $region73
    $region72: #{tpu_custom_call.1} parent=1 // pred_region
      %159 = dma.done [#allocation12], 16
    $region73: #{tpu_custom_call.1} parent=1 // pred_fallthru
      _
    // Predicated region
    $region74: #{tpu_custom_call.1} parent=1 // pred_check
      _
    $region75: #{tpu_custom_call.1} parent=1 // pred_check_branch
      %161 = sbr.rel (0) target = $region77
    $region76: #{tpu_custom_call.1} parent=1 // pred_region
      %162 = dma.done [#allocation15], 16
    $region77: #{tpu_custom_call.1} parent=1 // pred_fallthru
      _
    // Predicated region
    $region78: #{tpu_custom_call.1} parent=1 // pred_check
      _
    $region79: #{tpu_custom_call.1} parent=1 // pred_check_branch
      %164 = sbr.rel (0) target = $region81
    $region80: #{tpu_custom_call.1} parent=1 // pred_region
      %165 = dma.done [#allocation15], 16
    $region81: #{tpu_custom_call.1} parent=1 // pred_fallthru
      _
    // Predicated region
    $region82: #{tpu_custom_call.1} parent=1 // pred_check
      _
    $region83: #{tpu_custom_call.1} parent=1 // pred_check_branch
      %167 = sbr.rel (0) target = $region85
    $region84: #{tpu_custom_call.1} parent=1 // pred_region
      %168 = dma.done [#allocation18], 1024
    $region85: #{tpu_custom_call.1} parent=1 // pred_fallthru
      _
    // Predicated region
    $region86: #{tpu_custom_call.1} parent=1 // pred_check
      _
    $region87: #{tpu_custom_call.1} parent=1 // pred_check_branch
      %170 = sbr.rel (0) target = $region89
    $region88: #{tpu_custom_call.1} parent=1 // pred_region
      %171 = dma.done [#allocation18], 16
    $region89: #{tpu_custom_call.1} parent=1 // pred_fallthru
      _
    %v173 = vld [vmem:[#allocation2] sm:$0xf]
    %v174 = vld [vmem:[#allocation5] sm:$0xf]
    %v175 = vld [vmem:[#allocation5 + $0x4] sm:$0xf]
    %v176 = vld [vmem:[#allocation5 + $0x8] sm:$0xf]
    %v177 = vld [vmem:[#allocation5 + $0xc] sm:$0xf]
    %v178 = vld [vmem:[#allocation7] sm:$0x1]
    %v180 = vlaneseq
    %v181 = vshrl.u32 %v180, 7
    %v182 = vsub.s32 0, %v181
    %v183 = vrot.slane %v178, %v182
    %v189 = vunpack.c.l.b16 %v174
    %v190 = vunpack.c.l.b16 %v175
    %v191 = vunpack.c.l.b16 %v176
    %v192 = vunpack.c.l.b16 %v177
    %v193 = vpack.c.b16 %v190, %v189
    %v194 = vpack.c.b16 %v192, %v191
    %vm197 = vcmask 261120
    %v199 = vsel %vm197, %v173, 0
    %201 = vmatprep.subr.bf16.mxu0 0
    %202 = vmatpush1.bf16.msra.mxu0 %v193
    %203 = vmatprep.subr.bf16.mxu0 0
    %204 = vmatpush1.bf16.msra.mxu0 %v194
    %205 = vmatprep.subr.bf16.mxu0 0
    %206 = vmatpush1.bf16.msra.mxu0 0
    %207 = vmatprep.subr.bf16.mxu0 0
    %208 = vmatpush1.bf16.msra.mxu0 0
    %209 = vmatprep.subr.bf16.mxu0 0
    %210 = vmatpush1.bf16.msra.mxu0 0
    %211 = vmatprep.subr.bf16.mxu0 0
    %212 = vmatpush1.bf16.msra.mxu0 0
    %213 = vmatprep.subr.bf16.mxu0 0
    %214 = vmatpush1.bf16.msra.mxu0 0
    %215 = vmatprep.subr.bf16.mxu0 0
    %216 = vmatpush1.bf16.msra.mxu0 0
    %217 = vmatprep.subr.bf16.mxu0 0
    %218 = vmatpush1.bf16.msra.mxu0 0
    %219 = vmatprep.subr.bf16.mxu0 0
    %220 = vmatpush1.bf16.msra.mxu0 0
    %221 = vmatprep.subr.bf16.mxu0 0
    %222 = vmatpush1.bf16.msra.mxu0 0
    %223 = vmatprep.subr.bf16.mxu0 0
    %224 = vmatpush1.bf16.msra.mxu0 0
    %225 = vmatprep.subr.bf16.mxu0 0
    %226 = vmatpush1.bf16.msra.mxu0 0
    %227 = vmatprep.subr.bf16.mxu0 0
    %228 = vmatpush1.bf16.msra.mxu0 0
    %229 = vmatprep.subr.bf16.mxu0 0
    %230 = vmatpush1.bf16.msra.mxu0 0
    %231 = vmatprep.subr.bf16.mxu0 0
    %232 = vmatpush1.bf16.msra.mxu0 0
    %233 = vmatprep.mubr.bf16.mxu0 0
    %234 = vmatmul.mubr.bf16.gmra.mrb[0].mxu0 %v199
    %v235 = vpop.f32.mrb[0].mxu0
    %v236 = vadd.f32 %v183, %v235
    %v237 = vpop.f32.mrb[0].mxu0
    %v238 = vpop.f32.mrb[0].mxu0
    %v239 = vpop.f32.mrb[0].mxu0
    %240 = vdwg.mxu0
    %v241 = vmax.f32 %v236, 0.0
    %v242 = vld [vmem:[#allocation8] sm:$0x1]
    %v243 = vld [vmem:[#allocation10] sm:$0x1]
    %v244 = vrot.slane %v241, 4
    %v245 = vadd.f32 %v241, %v244
    %v246 = vrot.slane %v245, 2
    %v247 = vadd.f32 %v245, %v246
    %v248 = vrot.slane %v247, 1
    %v249 = vadd.f32 %v247, %v248
    %v250 = vmul.f32 %v241, %v241
    %v251 = vrot.slane %v250, 4
    %v252 = vadd.f32 %v250, %v251
    %v253 = vrot.slane %v252, 2
    %v254 = vadd.f32 %v252, %v253
    %v255 = vrot.slane %v254, 1
    %v256 = vadd.f32 %v254, %v255
    %v257 = vmul.f32 %v249, 0.125
    %v258 = vmul.f32 %v256, 0.125
    %v259 = vmul.f32 %v257, %v257
    %v260 = vsub.f32 %v258, %v259
    %v261 = vmax.f32 %v260, 0.0
    %v262 = vadd.f32 %v261, 1e-05
    %v263 = vrsqrt.pop %v262
    %v264 = vmul.f32 %v242, %v263
    %v265 = vmul.f32 %v257, %v264
    %v266 = vsub.f32 %v243, %v265
    %v268 = vlaneseq
    %v269 = vshrl.u32 %v268, 7
    %v270 = vsub.s32 0, %v269
    %v271 = vrot.slane %v264, %v270
    %v273 = vmul.f32 %v241, %v271
    %v275 = vlaneseq
    %v276 = vshrl.u32 %v275, 7
    %v277 = vsub.s32 0, %v276
    %v278 = vrot.slane %v266, %v277
    %v280 = vadd.f32 %v273, %v278
    %v281 = vpack.c.bf16 %v280, %v280
    %v282 = vld [vmem:[#allocation11] sm:$0xf]
    %v283 = vld [vmem:[#allocation11 + $0x4] sm:$0xf]
    %v284 = vld [vmem:[#allocation11 + $0x8] sm:$0xf]
    %v285 = vld [vmem:[#allocation11 + $0xc] sm:$0xf]
    %v286 = vld [vmem:[#allocation11 + $0x10] sm:$0xf]
    %v287 = vld [vmem:[#allocation11 + $0x14] sm:$0xf]
    %v288 = vld [vmem:[#allocation11 + $0x18] sm:$0xf]
    %v289 = vld [vmem:[#allocation11 + $0x1c] sm:$0xf]
    %v290 = vld [vmem:[#allocation11 + $0x20] sm:$0xf]
    %v291 = vld [vmem:[#allocation11 + $0x24] sm:$0xf]
    %v292 = vld [vmem:[#allocation11 + $0x28] sm:$0xf]
    %v293 = vld [vmem:[#allocation11 + $0x2c] sm:$0xf]
    %v294 = vld [vmem:[#allocation11 + $0x30] sm:$0xf]
    %v295 = vld [vmem:[#allocation11 + $0x34] sm:$0xf]
    %v296 = vld [vmem:[#allocation11 + $0x38] sm:$0xf]
    %v297 = vld [vmem:[#allocation11 + $0x3c] sm:$0xf]
    %v298 = vld [vmem:[#allocation13] sm:$0x1]
    %v300 = vlaneseq
    %v301 = vshrl.u32 %v300, 7
    %v302 = vsub.s32 0, %v301
    %v303 = vrot.slane %v298, %v302
    %v321 = vunpack.c.l.b16 %v282
    %v322 = vunpack.c.l.b16 %v283
    %v323 = vunpack.c.l.b16 %v284
    %v324 = vunpack.c.l.b16 %v285
    %v325 = vunpack.c.l.b16 %v286
    %v326 = vunpack.c.l.b16 %v287
    %v327 = vunpack.c.l.b16 %v288
    %v328 = vunpack.c.l.b16 %v289
    %v329 = vunpack.c.l.b16 %v290
    %v330 = vunpack.c.l.b16 %v291
    %v331 = vunpack.c.l.b16 %v292
    %v332 = vunpack.c.l.b16 %v293
    %v333 = vunpack.c.l.b16 %v294
    %v334 = vunpack.c.l.b16 %v295
    %v335 = vunpack.c.l.b16 %v296
    %v336 = vunpack.c.l.b16 %v297
    %v337 = vpack.c.b16 %v322, %v321
    %v338 = vpack.c.b16 %v324, %v323
    %v339 = vpack.c.b16 %v326, %v325
    %v340 = vpack.c.b16 %v328, %v327
    %v341 = vpack.c.b16 %v330, %v329
    %v342 = vpack.c.b16 %v332, %v331
    %v343 = vpack.c.b16 %v334, %v333
    %v344 = vpack.c.b16 %v336, %v335
    %353 = vmatprep.subr.bf16.mxu0 0
    %354 = vmatpush1.bf16.msra.mxu0 %v337
    %355 = vmatprep.subr.bf16.mxu0 0
    %356 = vmatpush1.bf16.msra.mxu0 %v338
    %357 = vmatprep.subr.bf16.mxu0 0
    %358 = vmatpush1.bf16.msra.mxu0 %v339
    %359 = vmatprep.subr.bf16.mxu0 0
    %360 = vmatpush1.bf16.msra.mxu0 %v340
    %361 = vmatprep.subr.bf16.mxu0 0
    %362 = vmatpush1.bf16.msra.mxu0 %v341
    %363 = vmatprep.subr.bf16.mxu0 0
    %364 = vmatpush1.bf16.msra.mxu0 %v342
    %365 = vmatprep.subr.bf16.mxu0 0
    %366 = vmatpush1.bf16.msra.mxu0 %v343
    %367 = vmatprep.subr.bf16.mxu0 0
    %368 = vmatpush1.bf16.msra.mxu0 %v344
    %369 = vmatprep.subr.bf16.mxu0 0
    %370 = vmatpush1.bf16.msra.mxu0 0
    %371 = vmatprep.subr.bf16.mxu0 0
    %372 = vmatpush1.bf16.msra.mxu0 0
    %373 = vmatprep.subr.bf16.mxu0 0
    %374 = vmatpush1.bf16.msra.mxu0 0
    %375 = vmatprep.subr.bf16.mxu0 0
    %376 = vmatpush1.bf16.msra.mxu0 0
    %377 = vmatprep.subr.bf16.mxu0 0
    %378 = vmatpush1.bf16.msra.mxu0 0
    %379 = vmatprep.subr.bf16.mxu0 0
    %380 = vmatpush1.bf16.msra.mxu0 0
    %381 = vmatprep.subr.bf16.mxu0 0
    %382 = vmatpush1.bf16.msra.mxu0 0
    %383 = vmatprep.subr.bf16.mxu0 0
    %384 = vmatpush1.bf16.msra.mxu0 0
    %385 = vmatprep.mubr.bf16.mxu0 0
    %386 = vmatmul.mubr.bf16.gmra.mrb[0].mxu0 %v281
    %v387 = vpop.f32.mrb[0].mxu0
    %v388 = vadd.f32 %v303, %v387
    %v389 = vpop.f32.mrb[0].mxu0
    %v390 = vpop.f32.mrb[0].mxu0
    %v391 = vpop.f32.mrb[0].mxu0
    %392 = vdwg.mxu0
    %v393 = vmax.f32 %v388, 0.0
    %v394 = vld [vmem:[#allocation14] sm:$0x1]
    %v395 = vld [vmem:[#allocation16] sm:$0x1]
    %v396 = vrot.slane %v393, 4
    %v397 = vadd.f32 %v393, %v396
    %v398 = vrot.slane %v397, 2
    %v399 = vadd.f32 %v397, %v398
    %v400 = vrot.slane %v399, 1
    %v401 = vadd.f32 %v399, %v400
    %v402 = vmul.f32 %v393, %v393
    %v403 = vrot.slane %v402, 4
    %v404 = vadd.f32 %v402, %v403
    %v405 = vrot.slane %v404, 2
    %v406 = vadd.f32 %v404, %v405
    %v407 = vrot.slane %v406, 1
    %v408 = vadd.f32 %v406, %v407
    %v409 = vmul.f32 %v401, 0.125
    %v410 = vmul.f32 %v408, 0.125
    %v411 = vmul.f32 %v409, %v409
    %v412 = vsub.f32 %v410, %v411
    %v413 = vmax.f32 %v412, 0.0
    %v414 = vadd.f32 %v413, 1e-05
    %v415 = vrsqrt.pop %v414
    %v416 = vmul.f32 %v394, %v415
    %v417 = vmul.f32 %v409, %v416
    %v418 = vsub.f32 %v395, %v417
    %v420 = vlaneseq
    %v421 = vshrl.u32 %v420, 7
    %v422 = vsub.s32 0, %v421
    %v423 = vrot.slane %v416, %v422
    %v425 = vmul.f32 %v393, %v423
    %v427 = vlaneseq
    %v428 = vshrl.u32 %v427, 7
    %v429 = vsub.s32 0, %v428
    %v430 = vrot.slane %v418, %v429
    %v432 = vadd.f32 %v425, %v430
    %v433 = vpack.c.bf16 %v432, %v432
    %v434 = vld [vmem:[#allocation17] sm:$0xf]
    %v435 = vld [vmem:[#allocation17 + $0x4] sm:$0xf]
    %v436 = vld [vmem:[#allocation17 + $0x8] sm:$0xf]
    %v437 = vld [vmem:[#allocation17 + $0xc] sm:$0xf]
    %v438 = vld [vmem:[#allocation17 + $0x10] sm:$0xf]
    %v439 = vld [vmem:[#allocation17 + $0x14] sm:$0xf]
    %v440 = vld [vmem:[#allocation17 + $0x18] sm:$0xf]
    %v441 = vld [vmem:[#allocation17 + $0x1c] sm:$0xf]
    %v442 = vld [vmem:[#allocation17 + $0x20] sm:$0xf]
    %v443 = vld [vmem:[#allocation17 + $0x24] sm:$0xf]
    %v444 = vld [vmem:[#allocation17 + $0x28] sm:$0xf]
    %v445 = vld [vmem:[#allocation17 + $0x2c] sm:$0xf]
    %v446 = vld [vmem:[#allocation17 + $0x30] sm:$0xf]
    %v447 = vld [vmem:[#allocation17 + $0x34] sm:$0xf]
    %v448 = vld [vmem:[#allocation17 + $0x38] sm:$0xf]
    %v449 = vld [vmem:[#allocation17 + $0x3c] sm:$0xf]
    %v450 = vld [vmem:[#allocation19] sm:$0x1]
    %v452 = vlaneseq
    %v453 = vshrl.u32 %v452, 7
    %v454 = vsub.s32 0, %v453
    %v455 = vrot.slane %v450, %v454
    %v473 = vunpack.c.l.b16 %v434
    %v474 = vunpack.c.l.b16 %v435
    %v475 = vunpack.c.l.b16 %v436
    %v476 = vunpack.c.l.b16 %v437
    %v477 = vunpack.c.l.b16 %v438
    %v478 = vunpack.c.l.b16 %v439
    %v479 = vunpack.c.l.b16 %v440
    %v480 = vunpack.c.l.b16 %v441
    %v481 = vunpack.c.l.b16 %v442
    %v482 = vunpack.c.l.b16 %v443
    %v483 = vunpack.c.l.b16 %v444
    %v484 = vunpack.c.l.b16 %v445
    %v485 = vunpack.c.l.b16 %v446
    %v486 = vunpack.c.l.b16 %v447
    %v487 = vunpack.c.l.b16 %v448
    %v488 = vunpack.c.l.b16 %v449
    %v489 = vpack.c.b16 %v474, %v473
    %v490 = vpack.c.b16 %v476, %v475
    %v491 = vpack.c.b16 %v478, %v477
    %v492 = vpack.c.b16 %v480, %v479
    %v493 = vpack.c.b16 %v482, %v481
    %v494 = vpack.c.b16 %v484, %v483
    %v495 = vpack.c.b16 %v486, %v485
    %v496 = vpack.c.b16 %v488, %v487
    %505 = vmatprep.subr.bf16.mxu0 0
    %506 = vmatpush1.bf16.msra.mxu0 %v489
    %507 = vmatprep.subr.bf16.mxu0 0
    %508 = vmatpush1.bf16.msra.mxu0 %v490
    %509 = vmatprep.subr.bf16.mxu0 0
    %510 = vmatpush1.bf16.msra.mxu0 %v491
    %511 = vmatprep.subr.bf16.mxu0 0
    %512 = vmatpush1.bf16.msra.mxu0 %v492
    %513 = vmatprep.subr.bf16.mxu0 0
    %514 = vmatpush1.bf16.msra.mxu0 %v493
    %515 = vmatprep.subr.bf16.mxu0 0
    %516 = vmatpush1.bf16.msra.mxu0 %v494
    %517 = vmatprep.subr.bf16.mxu0 0
    %518 = vmatpush1.bf16.msra.mxu0 %v495
    %519 = vmatprep.subr.bf16.mxu0 0
    %520 = vmatpush1.bf16.msra.mxu0 %v496
    %521 = vmatprep.subr.bf16.mxu0 0
    %522 = vmatpush1.bf16.msra.mxu0 0
    %523 = vmatprep.subr.bf16.mxu0 0
    %524 = vmatpush1.bf16.msra.mxu0 0
    %525 = vmatprep.subr.bf16.mxu0 0
    %526 = vmatpush1.bf16.msra.mxu0 0
    %527 = vmatprep.subr.bf16.mxu0 0
    %528 = vmatpush1.bf16.msra.mxu0 0
    %529 = vmatprep.subr.bf16.mxu0 0
    %530 = vmatpush1.bf16.msra.mxu0 0
    %531 = vmatprep.subr.bf16.mxu0 0
    %532 = vmatpush1.bf16.msra.mxu0 0
    %533 = vmatprep.subr.bf16.mxu0 0
    %534 = vmatpush1.bf16.msra.mxu0 0
    %535 = vmatprep.subr.bf16.mxu0 0
    %536 = vmatpush1.bf16.msra.mxu0 0
    %537 = vmatprep.mubr.bf16.mxu0 0
    %538 = vmatmul.mubr.bf16.gmra.mrb[0].mxu0 %v433
    %v539 = vpop.f32.mrb[0].mxu0
    %v540 = vadd.f32 %v455, %v539
    %v541 = vpop.f32.mrb[0].mxu0
    %v542 = vpop.f32.mrb[0].mxu0
    %v543 = vpop.f32.mrb[0].mxu0
    %544 = vdwg.mxu0
    %v545 = vmax.f32 %v540, 0.0
    %vm546 = vcmask 523264
    %547 = vst.msk [vmem:[#allocation20] sm:$0xff] %vm546, %v545
    // Predicated region
    $region90: #{tpu_custom_call.1} parent=1 // pred_check
      _
    $region91: #{tpu_custom_call.1} parent=1 // pred_check_branch
      %549 = sbr.rel (0) target = $region93
    $region92: #{tpu_custom_call.1} parent=1 // pred_region
      %s551 = ssub.s32 128, 128
      %552 = vsyncadd [#allocation4], %s551
      %s554 = sshll.u32 [#allocation20], 4
      %s555 = int_to_ptr.vmem [resolvable:$true] %s554
      %557 = dma.vmem_to_hbm [thread:$0]  %s555, 128, %s11, [#allocation4]
    $region93: #{tpu_custom_call.1} parent=1 // pred_fallthru
      _
    // Predicated region
    $region94: #{tpu_custom_call.1} parent=1 // pred_check
      _
    $region95: #{tpu_custom_call.1} parent=1 // pred_check_branch
      %559 = sbr.rel (0) target = $region97
    $region96: #{tpu_custom_call.1} parent=1 // pred_region
      %560 = dma.done [#allocation4], 128
    $region97: #{tpu_custom_call.1} parent=1 // pred_fallthru
      _
    %561 = vsyncpa [#allocation3], 1
    %562 = vsyncpa [#allocation6], 1
    %563 = vsyncpa [#allocation9], 1
    %564 = vsyncpa [#allocation12], 1
    %565 = vsyncpa [#allocation15], 1
    %566 = vsyncpa [#allocation18], 1
    %567 = vsyncpa [#allocation4], 1

</llo_original>
